<compile_context>
chip_gen: v6e
topology: v6e:2x2x1
jax: 0.10.0
libtpu: 0.0.40
codegen_flags: <defaults>
</compile_context>

<pallas_src>
import jax
import jax.numpy as jnp
from jax.experimental import pallas as pl
from jax.experimental.pallas import tpu as pltpu

MAX_REL = 32                      # max_relative_feature
NUM_CLASSES = 2 * MAX_REL + 2     # 66 one-hot classes (includes the "masked" class 65)
NUM_EMB = 32                      # num_embeddings (embedding width)
GROUP = 4                         # logical rows packed per output row; GROUP*NUM_EMB == 128
PAIR = 2                          # groups consumed per matmul -> K = PAIR*PAD_C = 256
PAD_C = 128                       # per-group padded class width (lane-aligned; >= 66 + 1 bias)
BIAS_CLASS = NUM_CLASSES          # index 66 inside each group block = always-on bias class
TILE_PACKED = 4096                # packed rows per grid step (= 4*4096 logical rows); tunable

assert GROUP * NUM_EMB == 128, "output packing assumes GROUP * NUM_EMB == 128 lanes"
assert GROUP % PAIR == 0
assert PAD_C > BIAS_CLASS


def _pe_kernel(d_ref, w_hi_ref, w_lo_ref, out_ref):
    # d_ref:    (T, GROUP) int32, class indices in [0, NUM_CLASSES-1]
    # w_hi_ref: (GROUP*PAD_C, GROUP*NUM_EMB) bf16 block-diagonal weight (bias folded in)
    # w_lo_ref: (GROUP*PAD_C, GROUP*NUM_EMB) bf16 residual (w_f32 - f32(w_hi))
    # out_ref:  (T, GROUP*NUM_EMB) f32 -- lane-dense (128 wide)
    d = d_ref[...]
    classes = jax.lax.broadcasted_iota(jnp.int32, (1, PAD_C), 1)   # (1, 128)
    bias_col = classes == BIAS_CLASS                               # always-on bias column

    acc = None
    for p in range(GROUP // PAIR):
        # Build the pair's (T, PAIR*PAD_C) bf16 one-hot and consume it immediately.
        pieces = []
        for c in range(PAIR * p, PAIR * p + PAIR):
            hit = (d[:, c:c + 1] == classes) | bias_col            # (T, 128) bool
            pieces.append(hit.astype(jnp.bfloat16))
        oh = jnp.concatenate(pieces, axis=1)                       # (T, 256) bf16

        r0 = PAIR * p * PAD_C                                      # rows of this pair's blocks
        w_hi = w_hi_ref[r0:r0 + PAIR * PAD_C, :]                   # (256, 128) bf16
        w_lo = w_lo_ref[r0:r0 + PAIR * PAD_C, :]
        part = (jnp.dot(oh, w_hi, preferred_element_type=jnp.float32)
                + jnp.dot(oh, w_lo, preferred_element_type=jnp.float32))
        acc = part if acc is None else acc + part

    out_ref[...] = acc


def _build_packed_weight(weight, bias):
    """Block-diagonal f32 weight (GROUP*PAD_C, GROUP*NUM_EMB) with a bias row per block."""
    w_bd = jnp.zeros((GROUP * PAD_C, GROUP * NUM_EMB), jnp.float32)
    for c in range(GROUP):
        r0, c0 = c * PAD_C, c * NUM_EMB
        w_bd = w_bd.at[r0:r0 + NUM_CLASSES, c0:c0 + NUM_EMB].set(weight)
        w_bd = w_bd.at[r0 + BIAS_CLASS, c0:c0 + NUM_EMB].set(bias)
    return w_bd


@jax.jit
def positional_encodings(offset, mask, weight, bias):
    """offset, mask: int32 (B, L, K); weight: (66, NUM_EMB) [torch weight.T]; bias: (NUM_EMB,)."""
    B, L, K = offset.shape
    n = B * L * K

    # One int32 class-index stream; clip/select/pad fuse into a single XLA elementwise pass.
    d = (jnp.clip(offset + MAX_REL, 0, 2 * MAX_REL) * mask
         + (1 - mask) * (2 * MAX_REL + 1)).astype(jnp.int32).reshape(-1)

    n_packed = pl.cdiv(n, GROUP)
    tile = min(TILE_PACKED, max(8, pl.cdiv(n_packed, 8) * 8))      # multiple of 8 sublanes
    n_packed_pad = pl.cdiv(n_packed, tile) * tile
    d = jnp.pad(d, (0, n_packed_pad * GROUP - n)).reshape(n_packed_pad, GROUP)

    # hi/lo bf16 split of the packed f32 weight (LHS one-hot is exact in bf16).
    w_bd = _build_packed_weight(weight, bias)
    w_hi = w_bd.astype(jnp.bfloat16)
    w_lo = (w_bd - w_hi.astype(jnp.float32)).astype(jnp.bfloat16)

    out = pl.pallas_call(
        _pe_kernel,
        out_shape=jax.ShapeDtypeStruct((n_packed_pad, GROUP * NUM_EMB), jnp.float32),
        grid_spec=pltpu.PrefetchScalarGridSpec(
            num_scalar_prefetch=0,
            grid=(n_packed_pad // tile,),
            in_specs=[
                pl.BlockSpec((tile, GROUP), lambda i: (i, 0)),                       # d rows
                pl.BlockSpec((GROUP * PAD_C, GROUP * NUM_EMB), lambda i: (0, 0)),    # w_hi
                pl.BlockSpec((GROUP * PAD_C, GROUP * NUM_EMB), lambda i: (0, 0)),    # w_lo
            ],
            out_specs=pl.BlockSpec((tile, GROUP * NUM_EMB), lambda i: (i, 0)),
        ),
        compiler_params=pltpu.CompilerParams(
            dimension_semantics=("parallel",),
            vmem_limit_bytes=32 * 1024 * 1024),
    )(d, w_hi, w_lo)

    # TODO(synk): emit bf16 (or fuse into the consumer) if the downstream op tolerates it;
    # the f32 (B,L,K,32) write is the remaining roofline once the MXU work is bf16.
    # (n_packed_pad, 128) -> (n_packed_pad*GROUP, NUM_EMB) is a free row-major reshape.
    return out.reshape(n_packed_pad * GROUP, NUM_EMB)[:n].reshape(B, L, K, NUM_EMB)


def _reference(offset, mask, weight, bias):
    d = jnp.clip(offset + MAX_REL, 0, 2 * MAX_REL) * mask + (1 - mask) * (2 * MAX_REL + 1)
    onehot = jax.nn.one_hot(d, NUM_CLASSES, dtype=jnp.float32)
    return onehot @ weight + bias


if __name__ == "__main__":
    key = jax.random.PRNGKey(0)
    k_off, k_msk, k_w, k_b = jax.random.split(key, 4)

    B, L, K = 2, 16, 16
    offset = jax.random.randint(k_off, (B, L, K), -48, 48, dtype=jnp.int32)
    mask = jax.random.randint(k_msk, (B, L, K), 0, 2, dtype=jnp.int32)

    # Deterministic Linear(2*max_rel+2, num_embeddings) parameters (synthetic init).
    bound = 1.0 / (NUM_CLASSES ** 0.5)
    weight = jax.random.uniform(k_w, (NUM_CLASSES, NUM_EMB), jnp.float32, -bound, bound)
    bias = jax.random.uniform(k_b, (NUM_EMB,), jnp.float32, -bound, bound)

    E = jax.block_until_ready(positional_encodings(offset, mask, weight, bias))

    E_ref = _reference(offset, mask, weight, bias)
    assert E.shape == (B, L, K, NUM_EMB)
    assert jnp.allclose(E, E_ref, atol=1e-5, rtol=1e-5), "mismatch vs reference"

    print("KERNEL_OK")
</pallas_src>

<mosaic_0001>
module attributes {stable_mosaic.version = 11 : i64} {
  func.func @_pe_kernel(%arg0: i32, %arg1: memref<128x4xi32, #tpu.memory_space<vmem>>, %arg2: memref<512x128xbf16, #tpu.memory_space<vmem>>, %arg3: memref<512x128xbf16, #tpu.memory_space<vmem>>, %arg4: memref<128x128xf32, #tpu.memory_space<vmem>>) attributes {dimension_semantics = [#tpu.dimension_semantics<parallel>], iteration_bounds = array<i64: 1>, scalar_prefetch = 0 : i64, scratch_operands = 0 : i64, tpu.core_type = #tpu.core_type<tc>, window_params = [{transform_indices = @transform_0, window_bounds = array<i64: 128, 4>}, {pipeline_mode = #tpu.pipeline_mode<synchronous>, transform_indices = @transform_1, window_bounds = array<i64: 512, 128>}, {pipeline_mode = #tpu.pipeline_mode<synchronous>, transform_indices = @transform_2, window_bounds = array<i64: 512, 128>}, {transform_indices = @transform_3, window_bounds = array<i64: 128, 128>}]} {
    %c0 = arith.constant 0 : index
    %c0_0 = arith.constant 0 : index
    %0 = vector.load %arg1[%c0, %c0_0] : memref<128x4xi32, #tpu.memory_space<vmem>>, vector<128x4xi32>
    %1 = tpu.iota {dimensions = array<i32: 1>} : vector<1x128xi32>
    %c66_i32 = arith.constant 66 : i32
    %2 = vector.broadcast %c66_i32 : i32 to vector<1x128xi32>
    %3 = arith.cmpi eq, %1, %2 : vector<1x128xi32>
    %4 = vector.extract_strided_slice %0 {offsets = [0, 0], sizes = [128, 1], strides = [1, 1]} : vector<128x4xi32> to vector<128x1xi32>
    %5 = vector.broadcast %4 : vector<128x1xi32> to vector<128x128xi32>
    %6 = vector.broadcast %1 : vector<1x128xi32> to vector<128x128xi32>
    %7 = arith.cmpi eq, %5, %6 : vector<128x128xi32>
    %8 = vector.broadcast %3 : vector<1x128xi1> to vector<128x128xi1>
    %9 = arith.ori %7, %8 : vector<128x128xi1>
    %10 = arith.extui %9 : vector<128x128xi1> to vector<128x128xi32>
    %11 = arith.sitofp %10 : vector<128x128xi32> to vector<128x128xf32>
    %12 = arith.truncf %11 : vector<128x128xf32> to vector<128x128xbf16>
    %13 = vector.extract_strided_slice %0 {offsets = [0, 1], sizes = [128, 1], strides = [1, 1]} : vector<128x4xi32> to vector<128x1xi32>
    %14 = vector.broadcast %13 : vector<128x1xi32> to vector<128x128xi32>
    %15 = vector.broadcast %1 : vector<1x128xi32> to vector<128x128xi32>
    %16 = arith.cmpi eq, %14, %15 : vector<128x128xi32>
    %17 = vector.broadcast %3 : vector<1x128xi1> to vector<128x128xi1>
    %18 = arith.ori %16, %17 : vector<128x128xi1>
    %19 = arith.extui %18 : vector<128x128xi1> to vector<128x128xi32>
    %20 = arith.sitofp %19 : vector<128x128xi32> to vector<128x128xf32>
    %21 = arith.truncf %20 : vector<128x128xf32> to vector<128x128xbf16>
    %22 = tpu.concatenate %12, %21 in 1 : vector<128x128xbf16>, vector<128x128xbf16> -> vector<128x256xbf16>
    %c0_1 = arith.constant 0 : index
    %c0_2 = arith.constant 0 : index
    %23 = vector.load %arg2[%c0_1, %c0_2] : memref<512x128xbf16, #tpu.memory_space<vmem>>, vector<256x128xbf16>
    %c0_3 = arith.constant 0 : index
    %c0_4 = arith.constant 0 : index
    %24 = vector.load %arg3[%c0_3, %c0_4] : memref<512x128xbf16, #tpu.memory_space<vmem>>, vector<256x128xbf16>
    %cst = arith.constant dense<0.000000e+00> : vector<128x128xf32>
    %25 = tpu.matmul %22, %23, %cst {dimension_numbers = #tpu.dot_dimension_numbers<[1], [0], [0], [1], [0, 0, 1, 1], [], []>} : vector<128x256xbf16>, vector<256x128xbf16>, vector<128x128xf32> -> vector<128x128xf32>
    %cst_5 = arith.constant dense<0.000000e+00> : vector<128x128xf32>
    %26 = tpu.matmul %22, %24, %cst_5 {dimension_numbers = #tpu.dot_dimension_numbers<[1], [0], [0], [1], [0, 0, 1, 1], [], []>} : vector<128x256xbf16>, vector<256x128xbf16>, vector<128x128xf32> -> vector<128x128xf32>
    %27 = arith.addf %25, %26 : vector<128x128xf32>
    %28 = vector.extract_strided_slice %0 {offsets = [0, 2], sizes = [128, 1], strides = [1, 1]} : vector<128x4xi32> to vector<128x1xi32>
    %29 = vector.broadcast %28 : vector<128x1xi32> to vector<128x128xi32>
    %30 = vector.broadcast %1 : vector<1x128xi32> to vector<128x128xi32>
    %31 = arith.cmpi eq, %29, %30 : vector<128x128xi32>
    %32 = vector.broadcast %3 : vector<1x128xi1> to vector<128x128xi1>
    %33 = arith.ori %31, %32 : vector<128x128xi1>
    %34 = arith.extui %33 : vector<128x128xi1> to vector<128x128xi32>
    %35 = arith.sitofp %34 : vector<128x128xi32> to vector<128x128xf32>
    %36 = arith.truncf %35 : vector<128x128xf32> to vector<128x128xbf16>
    %37 = vector.extract_strided_slice %0 {offsets = [0, 3], sizes = [128, 1], strides = [1, 1]} : vector<128x4xi32> to vector<128x1xi32>
    %38 = vector.broadcast %37 : vector<128x1xi32> to vector<128x128xi32>
    %39 = vector.broadcast %1 : vector<1x128xi32> to vector<128x128xi32>
    %40 = arith.cmpi eq, %38, %39 : vector<128x128xi32>
    %41 = vector.broadcast %3 : vector<1x128xi1> to vector<128x128xi1>
    %42 = arith.ori %40, %41 : vector<128x128xi1>
    %43 = arith.extui %42 : vector<128x128xi1> to vector<128x128xi32>
    %44 = arith.sitofp %43 : vector<128x128xi32> to vector<128x128xf32>
    %45 = arith.truncf %44 : vector<128x128xf32> to vector<128x128xbf16>
    %46 = tpu.concatenate %36, %45 in 1 : vector<128x128xbf16>, vector<128x128xbf16> -> vector<128x256xbf16>
    %c256 = arith.constant 256 : index
    %c0_6 = arith.constant 0 : index
    %47 = vector.load %arg2[%c256, %c0_6] : memref<512x128xbf16, #tpu.memory_space<vmem>>, vector<256x128xbf16>
    %c256_7 = arith.constant 256 : index
    %c0_8 = arith.constant 0 : index
    %48 = vector.load %arg3[%c256_7, %c0_8] : memref<512x128xbf16, #tpu.memory_space<vmem>>, vector<256x128xbf16>
    %cst_9 = arith.constant dense<0.000000e+00> : vector<128x128xf32>
    %49 = tpu.matmul %46, %47, %cst_9 {dimension_numbers = #tpu.dot_dimension_numbers<[1], [0], [0], [1], [0, 0, 1, 1], [], []>} : vector<128x256xbf16>, vector<256x128xbf16>, vector<128x128xf32> -> vector<128x128xf32>
    %cst_10 = arith.constant dense<0.000000e+00> : vector<128x128xf32>
    %50 = tpu.matmul %46, %48, %cst_10 {dimension_numbers = #tpu.dot_dimension_numbers<[1], [0], [0], [1], [0, 0, 1, 1], [], []>} : vector<128x256xbf16>, vector<256x128xbf16>, vector<128x128xf32> -> vector<128x128xf32>
    %51 = arith.addf %49, %50 : vector<128x128xf32>
    %52 = arith.addf %27, %51 : vector<128x128xf32>
    %c0_11 = arith.constant 0 : index
    %c0_12 = arith.constant 0 : index
    %53 = vector.load %arg4[%c0_11, %c0_12] : memref<128x128xf32, #tpu.memory_space<vmem>>, vector<128x128xf32>
    tpu.vector_store %arg4[%c0_11, %c0_12], %52 {strides = array<i32>} : memref<128x128xf32, #tpu.memory_space<vmem>>, vector<128x128xf32>,
    return
  }
  func.func @transform_0(%arg0: i32) -> (i32, i32) {
    %c0_i32 = arith.constant 0 : i32
    %c0_i32_0 = arith.constant 0 : i32
    return %arg0, %c0_i32 : i32, i32
  }
  func.func @transform_1(%arg0: i32) -> (i32, i32) {
    %c0_i32 = arith.constant 0 : i32
    %c0_i32_0 = arith.constant 0 : i32
    %c0_i32_1 = arith.constant 0 : i32
    return %c0_i32, %c0_i32_0 : i32, i32
  }
  func.func @transform_2(%arg0: i32) -> (i32, i32) {
    %c0_i32 = arith.constant 0 : i32
    %c0_i32_0 = arith.constant 0 : i32
    %c0_i32_1 = arith.constant 0 : i32
    return %c0_i32, %c0_i32_0 : i32, i32
  }
  func.func @transform_3(%arg0: i32) -> (i32, i32) {
    %c0_i32 = arith.constant 0 : i32
    %c0_i32_0 = arith.constant 0 : i32
    return %arg0, %c0_i32 : i32, i32
  }
}

</mosaic_0001>

<llo_original>
// kernel: positional_encodings.1
$region0: #{positional_encodings.1}
  #allocation0 [shape = 'u32[]', space=smem, size = 0x4, offset = 0x4, fixed_abs, tag = 'smem constant byte address 0x4 - core index']
  #allocation1 [shape = 'u32[144,128]{1,0:T(1,128)}', space=vmem, size = 0x12000, scoped, tag = 'internal scratch']
  %s0 = inlined_call_operand.vmem [shape: s32[128,4], index: 0, kind: input, shape index: {}]
  %s1 = inlined_call_operand.vmem [shape: bf16[512,128], index: 1, kind: input, shape index: {}]
  %s2 = inlined_call_operand.vmem [shape: bf16[512,128], index: 2, kind: input, shape index: {}]
  %s3 = inlined_call_operand.vmem [shape: f32[128,128], index: 3, kind: output, shape index: {}]
  %s4 = sld [smem:[#allocation0]]
  $region22: #{positional_encodings.1} parent=0
    _
  %s6 = ssub.s32 1, %s4
  %s7 = scalar_select 0, %s6, %s4
  // Predicated region
  $region2: #{positional_encodings.1} parent=0 // pred_check
    _
  $region3: #{positional_encodings.1} parent=0 // pred_check_branch
    %9 = sbr.rel (0) target = $region5
  $region4: #{positional_encodings.1} parent=0 // pred_region
    _
  $region5: #{positional_encodings.1} parent=0 // pred_fallthru
    _
  // Predicated region
  $region6: #{positional_encodings.1} parent=0 // pred_check
    _
  $region7: #{positional_encodings.1} parent=0 // pred_check_branch
    %11 = sbr.rel (0) target = $region9
  $region8: #{positional_encodings.1} parent=0 // pred_region
    _
  $region9: #{positional_encodings.1} parent=0 // pred_fallthru
    _
  // Predicated region
  $region10: #{positional_encodings.1} parent=0 // pred_check
    _
  $region11: #{positional_encodings.1} parent=0 // pred_check_branch
    %13 = sbr.rel (0) target = $region13
  $region12: #{positional_encodings.1} parent=0 // pred_region
    _
  $region13: #{positional_encodings.1} parent=0 // pred_fallthru
    _
  %v15 = vld [vmem:[%s0] sm:$0xff]
  %v16 = vld [vmem:[%s0 + $0x8] sm:$0xff]
  %v17 = vld [vmem:[%s0 + $0x10] sm:$0xff]
  %v18 = vld [vmem:[%s0 + $0x18] sm:$0xff]
  %v19 = vld [vmem:[%s0 + $0x20] sm:$0xff]
  %v20 = vld [vmem:[%s0 + $0x28] sm:$0xff]
  %v21 = vld [vmem:[%s0 + $0x30] sm:$0xff]
  %v22 = vld [vmem:[%s0 + $0x38] sm:$0xff]
  %v23 = vld [vmem:[%s0 + $0x40] sm:$0xff]
  %v24 = vld [vmem:[%s0 + $0x48] sm:$0xff]
  %v25 = vld [vmem:[%s0 + $0x50] sm:$0xff]
  %v26 = vld [vmem:[%s0 + $0x58] sm:$0xff]
  %v27 = vld [vmem:[%s0 + $0x60] sm:$0xff]
  %v28 = vld [vmem:[%s0 + $0x68] sm:$0xff]
  %v29 = vld [vmem:[%s0 + $0x70] sm:$0xff]
  %v30 = vld [vmem:[%s0 + $0x78] sm:$0xff]
  %v31 = vlaneseq
  %v32 = vand.u32 %v31, 127
  %vm33 = vcmp.eq.s32.totalorder %v32, 66
  %34 = vset.pattern.permute.xlu0 0
  %35 = vperm.xlu0 %34, %v15
  %v36 = vpop.permute.xlu0 %35
  %37 = vset.pattern.permute.xlu0 0
  %38 = vperm.xlu0 %37, %v16
  %v39 = vpop.permute.xlu0 %38
  %40 = vset.pattern.permute.xlu0 0
  %41 = vperm.xlu0 %40, %v17
  %v42 = vpop.permute.xlu0 %41
  %43 = vset.pattern.permute.xlu0 0
  %44 = vperm.xlu0 %43, %v18
  %v45 = vpop.permute.xlu0 %44
  %46 = vset.pattern.permute.xlu0 0
  %47 = vperm.xlu0 %46, %v19
  %v48 = vpop.permute.xlu0 %47
  %49 = vset.pattern.permute.xlu0 0
  %50 = vperm.xlu0 %49, %v20
  %v51 = vpop.permute.xlu0 %50
  %52 = vset.pattern.permute.xlu0 0
  %53 = vperm.xlu0 %52, %v21
  %v54 = vpop.permute.xlu0 %53
  %55 = vset.pattern.permute.xlu0 0
  %56 = vperm.xlu0 %55, %v22
  %v57 = vpop.permute.xlu0 %56
  %58 = vset.pattern.permute.xlu0 0
  %59 = vperm.xlu0 %58, %v23
  %v60 = vpop.permute.xlu0 %59
  %61 = vset.pattern.permute.xlu0 0
  %62 = vperm.xlu0 %61, %v24
  %v63 = vpop.permute.xlu0 %62
  %64 = vset.pattern.permute.xlu0 0
  %65 = vperm.xlu0 %64, %v25
  %v66 = vpop.permute.xlu0 %65
  %67 = vset.pattern.permute.xlu0 0
  %68 = vperm.xlu0 %67, %v26
  %v69 = vpop.permute.xlu0 %68
  %70 = vset.pattern.permute.xlu0 0
  %71 = vperm.xlu0 %70, %v27
  %v72 = vpop.permute.xlu0 %71
  %73 = vset.pattern.permute.xlu0 0
  %74 = vperm.xlu0 %73, %v28
  %v75 = vpop.permute.xlu0 %74
  %76 = vset.pattern.permute.xlu0 0
  %77 = vperm.xlu0 %76, %v29
  %v78 = vpop.permute.xlu0 %77
  %79 = vset.pattern.permute.xlu0 0
  %80 = vperm.xlu0 %79, %v30
  %v81 = vpop.permute.xlu0 %80
  %vm82 = vcmp.eq.s32.totalorder %v36, %v32
  %vm83 = vcmp.eq.s32.totalorder %v39, %v32
  %vm84 = vcmp.eq.s32.totalorder %v42, %v32
  %vm85 = vcmp.eq.s32.totalorder %v45, %v32
  %vm86 = vcmp.eq.s32.totalorder %v48, %v32
  %vm87 = vcmp.eq.s32.totalorder %v51, %v32
  %vm88 = vcmp.eq.s32.totalorder %v54, %v32
  %vm89 = vcmp.eq.s32.totalorder %v57, %v32
  %vm90 = vcmp.eq.s32.totalorder %v60, %v32
  %vm91 = vcmp.eq.s32.totalorder %v63, %v32
  %vm92 = vcmp.eq.s32.totalorder %v66, %v32
  %vm93 = vcmp.eq.s32.totalorder %v69, %v32
  %vm94 = vcmp.eq.s32.totalorder %v72, %v32
  %vm95 = vcmp.eq.s32.totalorder %v75, %v32
  %vm96 = vcmp.eq.s32.totalorder %v78, %v32
  %vm97 = vcmp.eq.s32.totalorder %v81, %v32
  %v98 = vsel %vm33, 1, 0
  %vm99 = vcmp.eq.s32.totalorder %v98, 1
  %vm100 = vmor %vm82, %vm99
  %vm101 = vmor %vm83, %vm99
  %vm102 = vmor %vm84, %vm99
  %vm103 = vmor %vm85, %vm99
  %vm104 = vmor %vm86, %vm99
  %vm105 = vmor %vm87, %vm99
  %vm106 = vmor %vm88, %vm99
  %vm107 = vmor %vm89, %vm99
  %vm108 = vmor %vm90, %vm99
  %vm109 = vmor %vm91, %vm99
  %vm110 = vmor %vm92, %vm99
  %vm111 = vmor %vm93, %vm99
  %vm112 = vmor %vm94, %vm99
  %vm113 = vmor %vm95, %vm99
  %vm114 = vmor %vm96, %vm99
  %vm115 = vmor %vm97, %vm99
  %v116 = vsel %vm100, 1, 0
  %v117 = vsel %vm101, 1, 0
  %v118 = vsel %vm102, 1, 0
  %v119 = vsel %vm103, 1, 0
  %v120 = vsel %vm104, 1, 0
  %v121 = vsel %vm105, 1, 0
  %v122 = vsel %vm106, 1, 0
  %v123 = vsel %vm107, 1, 0
  %v124 = vsel %vm108, 1, 0
  %v125 = vsel %vm109, 1, 0
  %v126 = vsel %vm110, 1, 0
  %v127 = vsel %vm111, 1, 0
  %v128 = vsel %vm112, 1, 0
  %v129 = vsel %vm113, 1, 0
  %v130 = vsel %vm114, 1, 0
  %v131 = vsel %vm115, 1, 0
  %v132 = vcvt.s32.f32 %v116
  %v133 = vcvt.s32.f32 %v117
  %v134 = vcvt.s32.f32 %v118
  %v135 = vcvt.s32.f32 %v119
  %v136 = vcvt.s32.f32 %v120
  %v137 = vcvt.s32.f32 %v121
  %v138 = vcvt.s32.f32 %v122
  %v139 = vcvt.s32.f32 %v123
  %v140 = vcvt.s32.f32 %v124
  %v141 = vcvt.s32.f32 %v125
  %v142 = vcvt.s32.f32 %v126
  %v143 = vcvt.s32.f32 %v127
  %v144 = vcvt.s32.f32 %v128
  %v145 = vcvt.s32.f32 %v129
  %v146 = vcvt.s32.f32 %v130
  %v147 = vcvt.s32.f32 %v131
  %v148 = vpack.c.bf16 %v133, %v132
  %v149 = vpack.c.bf16 %v135, %v134
  %v150 = vpack.c.bf16 %v137, %v136
  %v151 = vpack.c.bf16 %v139, %v138
  %v152 = vpack.c.bf16 %v141, %v140
  %v153 = vpack.c.bf16 %v143, %v142
  %v154 = vpack.c.bf16 %v145, %v144
  %v155 = vpack.c.bf16 %v147, %v146
  %156 = vset.pattern.permute.xlu0 1
  %157 = vperm.xlu0 %156, %v15
  %v158 = vpop.permute.xlu0 %157
  %159 = vset.pattern.permute.xlu0 1
  %160 = vperm.xlu0 %159, %v16
  %v161 = vpop.permute.xlu0 %160
  %162 = vset.pattern.permute.xlu0 1
  %163 = vperm.xlu0 %162, %v17
  %v164 = vpop.permute.xlu0 %163
  %165 = vset.pattern.permute.xlu0 1
  %166 = vperm.xlu0 %165, %v18
  %v167 = vpop.permute.xlu0 %166
  %168 = vset.pattern.permute.xlu0 1
  %169 = vperm.xlu0 %168, %v19
  %v170 = vpop.permute.xlu0 %169
  %171 = vset.pattern.permute.xlu0 1
  %172 = vperm.xlu0 %171, %v20
  %v173 = vpop.permute.xlu0 %172
  %174 = vset.pattern.permute.xlu0 1
  %175 = vperm.xlu0 %174, %v21
  %v176 = vpop.permute.xlu0 %175
  %177 = vset.pattern.permute.xlu0 1
  %178 = vperm.xlu0 %177, %v22
  %v179 = vpop.permute.xlu0 %178
  %180 = vset.pattern.permute.xlu0 1
  %181 = vperm.xlu0 %180, %v23
  %v182 = vpop.permute.xlu0 %181
  %183 = vset.pattern.permute.xlu0 1
  %184 = vperm.xlu0 %183, %v24
  %v185 = vpop.permute.xlu0 %184
  %186 = vset.pattern.permute.xlu0 1
  %187 = vperm.xlu0 %186, %v25
  %v188 = vpop.permute.xlu0 %187
  %189 = vset.pattern.permute.xlu0 1
  %190 = vperm.xlu0 %189, %v26
  %v191 = vpop.permute.xlu0 %190
  %192 = vset.pattern.permute.xlu0 1
  %193 = vperm.xlu0 %192, %v27
  %v194 = vpop.permute.xlu0 %193
  %195 = vset.pattern.permute.xlu0 1
  %196 = vperm.xlu0 %195, %v28
  %v197 = vpop.permute.xlu0 %196
  %198 = vset.pattern.permute.xlu0 1
  %199 = vperm.xlu0 %198, %v29
  %v200 = vpop.permute.xlu0 %199
  %201 = vset.pattern.permute.xlu0 1
  %202 = vperm.xlu0 %201, %v30
  %v203 = vpop.permute.xlu0 %202
  %vm204 = vcmp.eq.s32.totalorder %v158, %v32
  %vm205 = vcmp.eq.s32.totalorder %v161, %v32
  %vm206 = vcmp.eq.s32.totalorder %v164, %v32
  %vm207 = vcmp.eq.s32.totalorder %v167, %v32
  %vm208 = vcmp.eq.s32.totalorder %v170, %v32
  %vm209 = vcmp.eq.s32.totalorder %v173, %v32
  %vm210 = vcmp.eq.s32.totalorder %v176, %v32
  %vm211 = vcmp.eq.s32.totalorder %v179, %v32
  %vm212 = vcmp.eq.s32.totalorder %v182, %v32
  %vm213 = vcmp.eq.s32.totalorder %v185, %v32
  %vm214 = vcmp.eq.s32.totalorder %v188, %v32
  %vm215 = vcmp.eq.s32.totalorder %v191, %v32
  %vm216 = vcmp.eq.s32.totalorder %v194, %v32
  %vm217 = vcmp.eq.s32.totalorder %v197, %v32
  %vm218 = vcmp.eq.s32.totalorder %v200, %v32
  %vm219 = vcmp.eq.s32.totalorder %v203, %v32
  %vm220 = vmor %vm204, %vm99
  %vm221 = vmor %vm205, %vm99
  %vm222 = vmor %vm206, %vm99
  %vm223 = vmor %vm207, %vm99
  %vm224 = vmor %vm208, %vm99
  %vm225 = vmor %vm209, %vm99
  %vm226 = vmor %vm210, %vm99
  %vm227 = vmor %vm211, %vm99
  %vm228 = vmor %vm212, %vm99
  %vm229 = vmor %vm213, %vm99
  %vm230 = vmor %vm214, %vm99
  %vm231 = vmor %vm215, %vm99
  %vm232 = vmor %vm216, %vm99
  %vm233 = vmor %vm217, %vm99
  %vm234 = vmor %vm218, %vm99
  %vm235 = vmor %vm219, %vm99
  %v236 = vsel %vm220, 1, 0
  %v237 = vsel %vm221, 1, 0
  %v238 = vsel %vm222, 1, 0
  %v239 = vsel %vm223, 1, 0
  %v240 = vsel %vm224, 1, 0
  %v241 = vsel %vm225, 1, 0
  %v242 = vsel %vm226, 1, 0
  %v243 = vsel %vm227, 1, 0
  %v244 = vsel %vm228, 1, 0
  %v245 = vsel %vm229, 1, 0
  %v246 = vsel %vm230, 1, 0
  %v247 = vsel %vm231, 1, 0
  %v248 = vsel %vm232, 1, 0
  %v249 = vsel %vm233, 1, 0
  %v250 = vsel %vm234, 1, 0
  %v251 = vsel %vm235, 1, 0
  %v252 = vcvt.s32.f32 %v236
  %v253 = vcvt.s32.f32 %v237
  %v254 = vcvt.s32.f32 %v238
  %v255 = vcvt.s32.f32 %v239
  %v256 = vcvt.s32.f32 %v240
  %v257 = vcvt.s32.f32 %v241
  %v258 = vcvt.s32.f32 %v242
  %v259 = vcvt.s32.f32 %v243
  %v260 = vcvt.s32.f32 %v244
  %v261 = vcvt.s32.f32 %v245
  %v262 = vcvt.s32.f32 %v246
  %v263 = vcvt.s32.f32 %v247
  %v264 = vcvt.s32.f32 %v248
  %v265 = vcvt.s32.f32 %v249
  %v266 = vcvt.s32.f32 %v250
  %v267 = vcvt.s32.f32 %v251
  %v268 = vpack.c.bf16 %v253, %v252
  %v269 = vpack.c.bf16 %v255, %v254
  %v270 = vpack.c.bf16 %v257, %v256
  %v271 = vpack.c.bf16 %v259, %v258
  %v272 = vpack.c.bf16 %v261, %v260
  %v273 = vpack.c.bf16 %v263, %v262
  %v274 = vpack.c.bf16 %v265, %v264
  %v275 = vpack.c.bf16 %v267, %v266
  %v276 = vld [vmem:[%s1] sm:$0xf]
  %v277 = vld [vmem:[%s1 + $0x4] sm:$0xf]
  %v278 = vld [vmem:[%s1 + $0x8] sm:$0xf]
  %v279 = vld [vmem:[%s1 + $0xc] sm:$0xf]
  %v280 = vld [vmem:[%s1 + $0x10] sm:$0xf]
  %v281 = vld [vmem:[%s1 + $0x14] sm:$0xf]
  %v282 = vld [vmem:[%s1 + $0x18] sm:$0xf]
  %v283 = vld [vmem:[%s1 + $0x1c] sm:$0xf]
  %v284 = vld [vmem:[%s1 + $0x20] sm:$0xf]
  %v285 = vld [vmem:[%s1 + $0x24] sm:$0xf]
  %v286 = vld [vmem:[%s1 + $0x28] sm:$0xf]
  %v287 = vld [vmem:[%s1 + $0x2c] sm:$0xf]
  %v288 = vld [vmem:[%s1 + $0x30] sm:$0xf]
  %v289 = vld [vmem:[%s1 + $0x34] sm:$0xf]
  %v290 = vld [vmem:[%s1 + $0x38] sm:$0xf]
  %v291 = vld [vmem:[%s1 + $0x3c] sm:$0xf]
  %v292 = vld [vmem:[%s1 + $0x40] sm:$0xf]
  %v293 = vld [vmem:[%s1 + $0x44] sm:$0xf]
  %v294 = vld [vmem:[%s1 + $0x48] sm:$0xf]
  %v295 = vld [vmem:[%s1 + $0x4c] sm:$0xf]
  %v296 = vld [vmem:[%s1 + $0x50] sm:$0xf]
  %v297 = vld [vmem:[%s1 + $0x54] sm:$0xf]
  %v298 = vld [vmem:[%s1 + $0x58] sm:$0xf]
  %v299 = vld [vmem:[%s1 + $0x5c] sm:$0xf]
  %v300 = vld [vmem:[%s1 + $0x60] sm:$0xf]
  %v301 = vld [vmem:[%s1 + $0x64] sm:$0xf]
  %v302 = vld [vmem:[%s1 + $0x68] sm:$0xf]
  %v303 = vld [vmem:[%s1 + $0x6c] sm:$0xf]
  %v304 = vld [vmem:[%s1 + $0x70] sm:$0xf]
  %v305 = vld [vmem:[%s1 + $0x74] sm:$0xf]
  %v306 = vld [vmem:[%s1 + $0x78] sm:$0xf]
  %v307 = vld [vmem:[%s1 + $0x7c] sm:$0xf]
  %v308 = vld [vmem:[%s2] sm:$0xf]
  %v309 = vld [vmem:[%s2 + $0x4] sm:$0xf]
  %v310 = vld [vmem:[%s2 + $0x8] sm:$0xf]
  %v311 = vld [vmem:[%s2 + $0xc] sm:$0xf]
  %v312 = vld [vmem:[%s2 + $0x10] sm:$0xf]
  %v313 = vld [vmem:[%s2 + $0x14] sm:$0xf]
  %v314 = vld [vmem:[%s2 + $0x18] sm:$0xf]
  %v315 = vld [vmem:[%s2 + $0x1c] sm:$0xf]
  %v316 = vld [vmem:[%s2 + $0x20] sm:$0xf]
  %v317 = vld [vmem:[%s2 + $0x24] sm:$0xf]
  %v318 = vld [vmem:[%s2 + $0x28] sm:$0xf]
  %v319 = vld [vmem:[%s2 + $0x2c] sm:$0xf]
  %v320 = vld [vmem:[%s2 + $0x30] sm:$0xf]
  %v321 = vld [vmem:[%s2 + $0x34] sm:$0xf]
  %v322 = vld [vmem:[%s2 + $0x38] sm:$0xf]
  %v323 = vld [vmem:[%s2 + $0x3c] sm:$0xf]
  %v324 = vld [vmem:[%s2 + $0x40] sm:$0xf]
  %v325 = vld [vmem:[%s2 + $0x44] sm:$0xf]
  %v326 = vld [vmem:[%s2 + $0x48] sm:$0xf]
  %v327 = vld [vmem:[%s2 + $0x4c] sm:$0xf]
  %v328 = vld [vmem:[%s2 + $0x50] sm:$0xf]
  %v329 = vld [vmem:[%s2 + $0x54] sm:$0xf]
  %v330 = vld [vmem:[%s2 + $0x58] sm:$0xf]
  %v331 = vld [vmem:[%s2 + $0x5c] sm:$0xf]
  %v332 = vld [vmem:[%s2 + $0x60] sm:$0xf]
  %v333 = vld [vmem:[%s2 + $0x64] sm:$0xf]
  %v334 = vld [vmem:[%s2 + $0x68] sm:$0xf]
  %v335 = vld [vmem:[%s2 + $0x6c] sm:$0xf]
  %v336 = vld [vmem:[%s2 + $0x70] sm:$0xf]
  %v337 = vld [vmem:[%s2 + $0x74] sm:$0xf]
  %v338 = vld [vmem:[%s2 + $0x78] sm:$0xf]
  %v339 = vld [vmem:[%s2 + $0x7c] sm:$0xf]
  %v372 = vunpack.c.l.b16 %v308
  %v373 = vunpack.c.l.b16 %v309
  %v374 = vunpack.c.l.b16 %v310
  %v375 = vunpack.c.l.b16 %v311
  %v376 = vunpack.c.l.b16 %v312
  %v377 = vunpack.c.l.b16 %v313
  %v378 = vunpack.c.l.b16 %v314
  %v379 = vunpack.c.l.b16 %v315
  %v380 = vunpack.c.l.b16 %v316
  %v381 = vunpack.c.l.b16 %v317
  %v382 = vunpack.c.l.b16 %v318
  %v383 = vunpack.c.l.b16 %v319
  %v384 = vunpack.c.l.b16 %v320
  %v385 = vunpack.c.l.b16 %v321
  %v386 = vunpack.c.l.b16 %v322
  %v387 = vunpack.c.l.b16 %v323
  %v388 = vunpack.c.l.b16 %v324
  %v389 = vunpack.c.l.b16 %v325
  %v390 = vunpack.c.l.b16 %v326
  %v391 = vunpack.c.l.b16 %v327
  %v392 = vunpack.c.l.b16 %v328
  %v393 = vunpack.c.l.b16 %v329
  %v394 = vunpack.c.l.b16 %v330
  %v395 = vunpack.c.l.b16 %v331
  %v396 = vunpack.c.l.b16 %v332
  %v397 = vunpack.c.l.b16 %v333
  %v398 = vunpack.c.l.b16 %v334
  %v399 = vunpack.c.l.b16 %v335
  %v400 = vunpack.c.l.b16 %v336
  %v401 = vunpack.c.l.b16 %v337
  %v402 = vunpack.c.l.b16 %v338
  %v403 = vunpack.c.l.b16 %v339
  %v404 = vpack.c.b16 %v373, %v372
  %v405 = vpack.c.b16 %v375, %v374
  %v406 = vpack.c.b16 %v377, %v376
  %v407 = vpack.c.b16 %v379, %v378
  %v408 = vpack.c.b16 %v381, %v380
  %v409 = vpack.c.b16 %v383, %v382
  %v410 = vpack.c.b16 %v385, %v384
  %v411 = vpack.c.b16 %v387, %v386
  %v412 = vpack.c.b16 %v389, %v388
  %v413 = vpack.c.b16 %v391, %v390
  %v414 = vpack.c.b16 %v393, %v392
  %v415 = vpack.c.b16 %v395, %v394
  %v416 = vpack.c.b16 %v397, %v396
  %v417 = vpack.c.b16 %v399, %v398
  %v418 = vpack.c.b16 %v401, %v400
  %v419 = vpack.c.b16 %v403, %v402
  %436 = vmatprep.subr.bf16.mxu0 0
  %437 = vmatpush1.bf16.msra.mxu0 %v411
  %438 = vmatprep.subr.bf16.mxu0 0
  %439 = vmatpush1.bf16.msra.mxu0 %v410
  %440 = vmatprep.subr.bf16.mxu0 0
  %441 = vmatpush1.bf16.msra.mxu0 %v409
  %442 = vmatprep.subr.bf16.mxu0 0
  %443 = vmatpush1.bf16.msra.mxu0 %v408
  %444 = vmatprep.subr.bf16.mxu0 0
  %445 = vmatpush1.bf16.msra.mxu0 %v407
  %446 = vmatprep.subr.bf16.mxu0 0
  %447 = vmatpush1.bf16.msra.mxu0 %v406
  %448 = vmatprep.subr.bf16.mxu0 0
  %449 = vmatpush1.bf16.msra.mxu0 %v405
  %450 = vmatprep.subr.bf16.mxu0 0
  %451 = vmatpush1.bf16.msra.mxu0 %v404
  %452 = vmatprep.subr.bf16.mxu0 0
  %453 = vmatpush2.bf16.msra.mxu0 %v419
  %454 = vmatprep.subr.bf16.mxu0 0
  %455 = vmatpush2.bf16.msra.mxu0 %v418
  %456 = vmatprep.subr.bf16.mxu0 0
  %457 = vmatpush2.bf16.msra.mxu0 %v417
  %458 = vmatprep.subr.bf16.mxu0 0
  %459 = vmatpush2.bf16.msra.mxu0 %v416
  %460 = vmatprep.subr.bf16.mxu0 0
  %461 = vmatpush2.bf16.msra.mxu0 %v415
  %462 = vmatprep.subr.bf16.mxu0 0
  %463 = vmatpush2.bf16.msra.mxu0 %v414
  %464 = vmatprep.subr.bf16.mxu0 0
  %465 = vmatpush2.bf16.msra.mxu0 %v413
  %466 = vmatprep.subr.bf16.mxu0 0
  %467 = vmatpush2.bf16.msra.mxu0 %v412
  %468 = vmatprep.mubr.bf16.mxu0 %v268
  %469 = vmatmul.mubr.bf16.gmra.mxu0 %v148
  %v470 = vpop.f32.mrf.mxu0
  %v471 = vadd.f32 0.0, %v470
  %v472 = vpop.f32.mrf.mxu0
  %v473 = vpop.f32.mrf.mxu0
  %v474 = vadd.f32 0.0, %v473
  %v475 = vpop.f32.mrf.mxu0
  %476 = vmatprep.mubr.bf16.mxu0 %v269
  %477 = vmatmul.mubr.bf16.gmra.mxu0 %v149
  %v478 = vpop.f32.mrf.mxu0
  %v479 = vadd.f32 0.0, %v478
  %v480 = vpop.f32.mrf.mxu0
  %v481 = vpop.f32.mrf.mxu0
  %v482 = vadd.f32 0.0, %v481
  %v483 = vpop.f32.mrf.mxu0
  %484 = vmatprep.mubr.bf16.mxu0 %v270
  %485 = vmatmul.mubr.bf16.gmra.mxu0 %v150
  %v486 = vpop.f32.mrf.mxu0
  %v487 = vadd.f32 0.0, %v486
  %v488 = vpop.f32.mrf.mxu0
  %v489 = vpop.f32.mrf.mxu0
  %v490 = vadd.f32 0.0, %v489
  %v491 = vpop.f32.mrf.mxu0
  %492 = vmatprep.mubr.bf16.mxu0 %v271
  %493 = vmatmul.mubr.bf16.gmra.mxu0 %v151
  %v494 = vpop.f32.mrf.mxu0
  %v495 = vadd.f32 0.0, %v494
  %v496 = vpop.f32.mrf.mxu0
  %v497 = vpop.f32.mrf.mxu0
  %v498 = vadd.f32 0.0, %v497
  %v499 = vpop.f32.mrf.mxu0
  %500 = vmatprep.mubr.bf16.mxu0 %v272
  %501 = vmatmul.mubr.bf16.gmra.mxu0 %v152
  %v502 = vpop.f32.mrf.mxu0
  %v503 = vadd.f32 0.0, %v502
  %v504 = vpop.f32.mrf.mxu0
  %v505 = vpop.f32.mrf.mxu0
  %v506 = vadd.f32 0.0, %v505
  %v507 = vpop.f32.mrf.mxu0
  %508 = vmatprep.mubr.bf16.mxu0 %v273
  %509 = vmatmul.mubr.bf16.gmra.mxu0 %v153
  %v510 = vpop.f32.mrf.mxu0
  %v511 = vadd.f32 0.0, %v510
  %v512 = vpop.f32.mrf.mxu0
  %v513 = vpop.f32.mrf.mxu0
  %v514 = vadd.f32 0.0, %v513
  %v515 = vpop.f32.mrf.mxu0
  %516 = vmatprep.mubr.bf16.mxu0 %v274
  %517 = vmatmul.mubr.bf16.gmra.mxu0 %v154
  %v518 = vpop.f32.mrf.mxu0
  %v519 = vadd.f32 0.0, %v518
  %v520 = vpop.f32.mrf.mxu0
  %v521 = vpop.f32.mrf.mxu0
  %v522 = vadd.f32 0.0, %v521
  %v523 = vpop.f32.mrf.mxu0
  %524 = vmatprep.mubr.bf16.mxu0 %v275
  %525 = vmatmul.mubr.bf16.gmra.mxu0 %v155
  %v526 = vpop.f32.mrf.mxu0
  %v527 = vadd.f32 0.0, %v526
  %v528 = vpop.f32.mrf.mxu0
  %v529 = vpop.f32.mrf.mxu0
  %v530 = vadd.f32 0.0, %v529
  %v531 = vpop.f32.mrf.mxu0
  %532 = vdwg.mxu0
  %v565 = vunpack.c.l.b16 %v276
  %v566 = vunpack.c.l.b16 %v277
  %v567 = vunpack.c.l.b16 %v278
  %v568 = vunpack.c.l.b16 %v279
  %v569 = vunpack.c.l.b16 %v280
  %v570 = vunpack.c.l.b16 %v281
  %v571 = vunpack.c.l.b16 %v282
  %v572 = vunpack.c.l.b16 %v283
  %v573 = vunpack.c.l.b16 %v284
  %v574 = vunpack.c.l.b16 %v285
  %v575 = vunpack.c.l.b16 %v286
  %v576 = vunpack.c.l.b16 %v287
  %v577 = vunpack.c.l.b16 %v288
  %v578 = vunpack.c.l.b16 %v289
  %v579 = vunpack.c.l.b16 %v290
  %v580 = vunpack.c.l.b16 %v291
  %v581 = vunpack.c.l.b16 %v292
  %v582 = vunpack.c.l.b16 %v293
  %v583 = vunpack.c.l.b16 %v294
  %v584 = vunpack.c.l.b16 %v295
  %v585 = vunpack.c.l.b16 %v296
  %v586 = vunpack.c.l.b16 %v297
  %v587 = vunpack.c.l.b16 %v298
  %v588 = vunpack.c.l.b16 %v299
  %v589 = vunpack.c.l.b16 %v300
  %v590 = vunpack.c.l.b16 %v301
  %v591 = vunpack.c.l.b16 %v302
  %v592 = vunpack.c.l.b16 %v303
  %v593 = vunpack.c.l.b16 %v304
  %v594 = vunpack.c.l.b16 %v305
  %v595 = vunpack.c.l.b16 %v306
  %v596 = vunpack.c.l.b16 %v307
  %v597 = vpack.c.b16 %v566, %v565
  %v598 = vpack.c.b16 %v568, %v567
  %v599 = vpack.c.b16 %v570, %v569
  %v600 = vpack.c.b16 %v572, %v571
  %v601 = vpack.c.b16 %v574, %v573
  %v602 = vpack.c.b16 %v576, %v575
  %v603 = vpack.c.b16 %v578, %v577
  %v604 = vpack.c.b16 %v580, %v579
  %v605 = vpack.c.b16 %v582, %v581
  %v606 = vpack.c.b16 %v584, %v583
  %v607 = vpack.c.b16 %v586, %v585
  %v608 = vpack.c.b16 %v588, %v587
  %v609 = vpack.c.b16 %v590, %v589
  %v610 = vpack.c.b16 %v592, %v591
  %v611 = vpack.c.b16 %v594, %v593
  %v612 = vpack.c.b16 %v596, %v595
  %629 = vmatprep.subr.bf16.mxu0 0
  %630 = vmatpush1.bf16.msra.mxu0 %v604
  %631 = vmatprep.subr.bf16.mxu0 0
  %632 = vmatpush1.bf16.msra.mxu0 %v603
  %633 = vmatprep.subr.bf16.mxu0 0
  %634 = vmatpush1.bf16.msra.mxu0 %v602
  %635 = vmatprep.subr.bf16.mxu0 0
  %636 = vmatpush1.bf16.msra.mxu0 %v601
  %637 = vmatprep.subr.bf16.mxu0 0
  %638 = vmatpush1.bf16.msra.mxu0 %v600
  %639 = vmatprep.subr.bf16.mxu0 0
  %640 = vmatpush1.bf16.msra.mxu0 %v599
  %641 = vmatprep.subr.bf16.mxu0 0
  %642 = vmatpush1.bf16.msra.mxu0 %v598
  %643 = vmatprep.subr.bf16.mxu0 0
  %644 = vmatpush1.bf16.msra.mxu0 %v597
  %645 = vmatprep.subr.bf16.mxu0 0
  %646 = vmatpush2.bf16.msra.mxu0 %v612
  %647 = vmatprep.subr.bf16.mxu0 0
  %648 = vmatpush2.bf16.msra.mxu0 %v611
  %649 = vmatprep.subr.bf16.mxu0 0
  %650 = vmatpush2.bf16.msra.mxu0 %v610
  %651 = vmatprep.subr.bf16.mxu0 0
  %652 = vmatpush2.bf16.msra.mxu0 %v609
  %653 = vmatprep.subr.bf16.mxu0 0
  %654 = vmatpush2.bf16.msra.mxu0 %v608
  %655 = vmatprep.subr.bf16.mxu0 0
  %656 = vmatpush2.bf16.msra.mxu0 %v607
  %657 = vmatprep.subr.bf16.mxu0 0
  %658 = vmatpush2.bf16.msra.mxu0 %v606
  %659 = vmatprep.subr.bf16.mxu0 0
  %660 = vmatpush2.bf16.msra.mxu0 %v605
  %661 = vmatprep.mubr.bf16.mxu0 %v268
  %662 = vmatmul.mubr.bf16.gmra.mxu0 %v148
  %v663 = vpop.f32.mrf.mxu0
  %v664 = vadd.f32 %v471, %v663
  %v665 = vpop.f32.mrf.mxu0
  %v666 = vpop.f32.mrf.mxu0
  %v667 = vadd.f32 %v474, %v666
  %v668 = vpop.f32.mrf.mxu0
  %669 = vmatprep.mubr.bf16.mxu0 %v269
  %670 = vmatmul.mubr.bf16.gmra.mxu0 %v149
  %v671 = vpop.f32.mrf.mxu0
  %v672 = vadd.f32 %v479, %v671
  %v673 = vpop.f32.mrf.mxu0
  %v674 = vpop.f32.mrf.mxu0
  %v675 = vadd.f32 %v482, %v674
  %v676 = vpop.f32.mrf.mxu0
  %677 = vmatprep.mubr.bf16.mxu0 %v270
  %678 = vmatmul.mubr.bf16.gmra.mxu0 %v150
  %v679 = vpop.f32.mrf.mxu0
  %v680 = vadd.f32 %v487, %v679
  %v681 = vpop.f32.mrf.mxu0
  %v682 = vpop.f32.mrf.mxu0
  %v683 = vadd.f32 %v490, %v682
  %v684 = vpop.f32.mrf.mxu0
  %685 = vmatprep.mubr.bf16.mxu0 %v271
  %686 = vmatmul.mubr.bf16.gmra.mxu0 %v151
  %v687 = vpop.f32.mrf.mxu0
  %v688 = vadd.f32 %v495, %v687
  %v689 = vpop.f32.mrf.mxu0
  %v690 = vpop.f32.mrf.mxu0
  %v691 = vadd.f32 %v498, %v690
  %v692 = vpop.f32.mrf.mxu0
  %693 = vmatprep.mubr.bf16.mxu0 %v272
  %694 = vmatmul.mubr.bf16.gmra.mxu0 %v152
  %v695 = vpop.f32.mrf.mxu0
  %v696 = vadd.f32 %v503, %v695
  %v697 = vpop.f32.mrf.mxu0
  %v698 = vpop.f32.mrf.mxu0
  %v699 = vadd.f32 %v506, %v698
  %v700 = vpop.f32.mrf.mxu0
  %701 = vmatprep.mubr.bf16.mxu0 %v273
  %702 = vmatmul.mubr.bf16.gmra.mxu0 %v153
  %v703 = vpop.f32.mrf.mxu0
  %v704 = vadd.f32 %v511, %v703
  %v705 = vpop.f32.mrf.mxu0
  %v706 = vpop.f32.mrf.mxu0
  %v707 = vadd.f32 %v514, %v706
  %v708 = vpop.f32.mrf.mxu0
  %709 = vmatprep.mubr.bf16.mxu0 %v274
  %710 = vmatmul.mubr.bf16.gmra.mxu0 %v154
  %v711 = vpop.f32.mrf.mxu0
  %v712 = vadd.f32 %v519, %v711
  %v713 = vpop.f32.mrf.mxu0
  %v714 = vpop.f32.mrf.mxu0
  %v715 = vadd.f32 %v522, %v714
  %v716 = vpop.f32.mrf.mxu0
  %717 = vmatprep.mubr.bf16.mxu0 %v275
  %718 = vmatmul.mubr.bf16.gmra.mxu0 %v155
  %v719 = vpop.f32.mrf.mxu0
  %v720 = vadd.f32 %v527, %v719
  %v721 = vpop.f32.mrf.mxu0
  %v722 = vpop.f32.mrf.mxu0
  %v723 = vadd.f32 %v530, %v722
  %v724 = vpop.f32.mrf.mxu0
  %725 = vdwg.mxu0
  %726 = vset.pattern.permute.xlu0 2
  %727 = vperm.xlu0 %726, %v15
  %v728 = vpop.permute.xlu0 %727
  %729 = vset.pattern.permute.xlu0 2
  %730 = vperm.xlu0 %729, %v16
  %v731 = vpop.permute.xlu0 %730
  %732 = vset.pattern.permute.xlu0 2
  %733 = vperm.xlu0 %732, %v17
  %v734 = vpop.permute.xlu0 %733
  %735 = vset.pattern.permute.xlu0 2
  %736 = vperm.xlu0 %735, %v18
  %v737 = vpop.permute.xlu0 %736
  %738 = vset.pattern.permute.xlu0 2
  %739 = vperm.xlu0 %738, %v19
  %v740 = vpop.permute.xlu0 %739
  %741 = vset.pattern.permute.xlu0 2
  %742 = vperm.xlu0 %741, %v20
  %v743 = vpop.permute.xlu0 %742
  %744 = vset.pattern.permute.xlu0 2
  %745 = vperm.xlu0 %744, %v21
  %v746 = vpop.permute.xlu0 %745
  %747 = vset.pattern.permute.xlu0 2
  %748 = vperm.xlu0 %747, %v22
  %v749 = vpop.permute.xlu0 %748
  %750 = vset.pattern.permute.xlu0 2
  %751 = vperm.xlu0 %750, %v23
  %v752 = vpop.permute.xlu0 %751
  %753 = vset.pattern.permute.xlu0 2
  %754 = vperm.xlu0 %753, %v24
  %v755 = vpop.permute.xlu0 %754
  %756 = vset.pattern.permute.xlu0 2
  %757 = vperm.xlu0 %756, %v25
  %v758 = vpop.permute.xlu0 %757
  %759 = vset.pattern.permute.xlu0 2
  %760 = vperm.xlu0 %759, %v26
  %v761 = vpop.permute.xlu0 %760
  %762 = vset.pattern.permute.xlu0 2
  %763 = vperm.xlu0 %762, %v27
  %v764 = vpop.permute.xlu0 %763
  %765 = vset.pattern.permute.xlu0 2
  %766 = vperm.xlu0 %765, %v28
  %v767 = vpop.permute.xlu0 %766
  %768 = vset.pattern.permute.xlu0 2
  %769 = vperm.xlu0 %768, %v29
  %v770 = vpop.permute.xlu0 %769
  %771 = vset.pattern.permute.xlu0 2
  %772 = vperm.xlu0 %771, %v30
  %v773 = vpop.permute.xlu0 %772
  %vm774 = vcmp.eq.s32.totalorder %v728, %v32
  %vm775 = vcmp.eq.s32.totalorder %v731, %v32
  %vm776 = vcmp.eq.s32.totalorder %v734, %v32
  %vm777 = vcmp.eq.s32.totalorder %v737, %v32
  %vm778 = vcmp.eq.s32.totalorder %v740, %v32
  %vm779 = vcmp.eq.s32.totalorder %v743, %v32
  %vm780 = vcmp.eq.s32.totalorder %v746, %v32
  %vm781 = vcmp.eq.s32.totalorder %v749, %v32
  %vm782 = vcmp.eq.s32.totalorder %v752, %v32
  %vm783 = vcmp.eq.s32.totalorder %v755, %v32
  %vm784 = vcmp.eq.s32.totalorder %v758, %v32
  %vm785 = vcmp.eq.s32.totalorder %v761, %v32
  %vm786 = vcmp.eq.s32.totalorder %v764, %v32
  %vm787 = vcmp.eq.s32.totalorder %v767, %v32
  %vm788 = vcmp.eq.s32.totalorder %v770, %v32
  %vm789 = vcmp.eq.s32.totalorder %v773, %v32
  %vm790 = vmor %vm774, %vm99
  %vm791 = vmor %vm775, %vm99
  %vm792 = vmor %vm776, %vm99
  %vm793 = vmor %vm777, %vm99
  %vm794 = vmor %vm778, %vm99
  %vm795 = vmor %vm779, %vm99
  %vm796 = vmor %vm780, %vm99
  %vm797 = vmor %vm781, %vm99
  %vm798 = vmor %vm782, %vm99
  %vm799 = vmor %vm783, %vm99
  %vm800 = vmor %vm784, %vm99
  %vm801 = vmor %vm785, %vm99
  %vm802 = vmor %vm786, %vm99
  %vm803 = vmor %vm787, %vm99
  %vm804 = vmor %vm788, %vm99
  %vm805 = vmor %vm789, %vm99
  %v806 = vsel %vm790, 1, 0
  %v807 = vsel %vm791, 1, 0
  %v808 = vsel %vm792, 1, 0
  %v809 = vsel %vm793, 1, 0
  %v810 = vsel %vm794, 1, 0
  %v811 = vsel %vm795, 1, 0
  %v812 = vsel %vm796, 1, 0
  %v813 = vsel %vm797, 1, 0
  %v814 = vsel %vm798, 1, 0
  %v815 = vsel %vm799, 1, 0
  %v816 = vsel %vm800, 1, 0
  %v817 = vsel %vm801, 1, 0
  %v818 = vsel %vm802, 1, 0
  %v819 = vsel %vm803, 1, 0
  %v820 = vsel %vm804, 1, 0
  %v821 = vsel %vm805, 1, 0
  %v822 = vcvt.s32.f32 %v806
  %v823 = vcvt.s32.f32 %v807
  %v824 = vcvt.s32.f32 %v808
  %v825 = vcvt.s32.f32 %v809
  %v826 = vcvt.s32.f32 %v810
  %v827 = vcvt.s32.f32 %v811
  %v828 = vcvt.s32.f32 %v812
  %v829 = vcvt.s32.f32 %v813
  %v830 = vcvt.s32.f32 %v814
  %v831 = vcvt.s32.f32 %v815
  %v832 = vcvt.s32.f32 %v816
  %v833 = vcvt.s32.f32 %v817
  %v834 = vcvt.s32.f32 %v818
  %v835 = vcvt.s32.f32 %v819
  %v836 = vcvt.s32.f32 %v820
  %v837 = vcvt.s32.f32 %v821
  %v838 = vpack.c.bf16 %v823, %v822
  %v839 = vpack.c.bf16 %v825, %v824
  %v840 = vpack.c.bf16 %v827, %v826
  %v841 = vpack.c.bf16 %v829, %v828
  %v842 = vpack.c.bf16 %v831, %v830
  %v843 = vpack.c.bf16 %v833, %v832
  %v844 = vpack.c.bf16 %v835, %v834
  %v845 = vpack.c.bf16 %v837, %v836
  %846 = vset.pattern.permute.xlu0 3
  %847 = vperm.xlu0 %846, %v15
  %v848 = vpop.permute.xlu0 %847
  %849 = vset.pattern.permute.xlu0 3
  %850 = vperm.xlu0 %849, %v16
  %v851 = vpop.permute.xlu0 %850
  %852 = vset.pattern.permute.xlu0 3
  %853 = vperm.xlu0 %852, %v17
  %v854 = vpop.permute.xlu0 %853
  %855 = vset.pattern.permute.xlu0 3
  %856 = vperm.xlu0 %855, %v18
  %v857 = vpop.permute.xlu0 %856
  %858 = vset.pattern.permute.xlu0 3
  %859 = vperm.xlu0 %858, %v19
  %v860 = vpop.permute.xlu0 %859
  %861 = vset.pattern.permute.xlu0 3
  %862 = vperm.xlu0 %861, %v20
  %v863 = vpop.permute.xlu0 %862
  %864 = vset.pattern.permute.xlu0 3
  %865 = vperm.xlu0 %864, %v21
  %v866 = vpop.permute.xlu0 %865
  %867 = vset.pattern.permute.xlu0 3
  %868 = vperm.xlu0 %867, %v22
  %v869 = vpop.permute.xlu0 %868
  %870 = vset.pattern.permute.xlu0 3
  %871 = vperm.xlu0 %870, %v23
  %v872 = vpop.permute.xlu0 %871
  %873 = vset.pattern.permute.xlu0 3
  %874 = vperm.xlu0 %873, %v24
  %v875 = vpop.permute.xlu0 %874
  %876 = vset.pattern.permute.xlu0 3
  %877 = vperm.xlu0 %876, %v25
  %v878 = vpop.permute.xlu0 %877
  %879 = vset.pattern.permute.xlu0 3
  %880 = vperm.xlu0 %879, %v26
  %v881 = vpop.permute.xlu0 %880
  %882 = vset.pattern.permute.xlu0 3
  %883 = vperm.xlu0 %882, %v27
  %v884 = vpop.permute.xlu0 %883
  %885 = vset.pattern.permute.xlu0 3
  %886 = vperm.xlu0 %885, %v28
  %v887 = vpop.permute.xlu0 %886
  %888 = vset.pattern.permute.xlu0 3
  %889 = vperm.xlu0 %888, %v29
  %v890 = vpop.permute.xlu0 %889
  %891 = vset.pattern.permute.xlu0 3
  %892 = vperm.xlu0 %891, %v30
  %v893 = vpop.permute.xlu0 %892
  %vm894 = vcmp.eq.s32.totalorder %v848, %v32
  %vm895 = vcmp.eq.s32.totalorder %v851, %v32
  %vm896 = vcmp.eq.s32.totalorder %v854, %v32
  %vm897 = vcmp.eq.s32.totalorder %v857, %v32
  %vm898 = vcmp.eq.s32.totalorder %v860, %v32
  %vm899 = vcmp.eq.s32.totalorder %v863, %v32
  %vm900 = vcmp.eq.s32.totalorder %v866, %v32
  %vm901 = vcmp.eq.s32.totalorder %v869, %v32
  %vm902 = vcmp.eq.s32.totalorder %v872, %v32
  %vm903 = vcmp.eq.s32.totalorder %v875, %v32
  %vm904 = vcmp.eq.s32.totalorder %v878, %v32
  %vm905 = vcmp.eq.s32.totalorder %v881, %v32
  %vm906 = vcmp.eq.s32.totalorder %v884, %v32
  %vm907 = vcmp.eq.s32.totalorder %v887, %v32
  %vm908 = vcmp.eq.s32.totalorder %v890, %v32
  %vm909 = vcmp.eq.s32.totalorder %v893, %v32
  %vm910 = vmor %vm894, %vm99
  %vm911 = vmor %vm895, %vm99
  %vm912 = vmor %vm896, %vm99
  %vm913 = vmor %vm897, %vm99
  %vm914 = vmor %vm898, %vm99
  %vm915 = vmor %vm899, %vm99
  %vm916 = vmor %vm900, %vm99
  %vm917 = vmor %vm901, %vm99
  %vm918 = vmor %vm902, %vm99
  %vm919 = vmor %vm903, %vm99
  %vm920 = vmor %vm904, %vm99
  %vm921 = vmor %vm905, %vm99
  %vm922 = vmor %vm906, %vm99
  %vm923 = vmor %vm907, %vm99
  %vm924 = vmor %vm908, %vm99
  %vm925 = vmor %vm909, %vm99
  %v926 = vsel %vm910, 1, 0
  %v927 = vsel %vm911, 1, 0
  %v928 = vsel %vm912, 1, 0
  %v929 = vsel %vm913, 1, 0
  %v930 = vsel %vm914, 1, 0
  %v931 = vsel %vm915, 1, 0
  %v932 = vsel %vm916, 1, 0
  %v933 = vsel %vm917, 1, 0
  %v934 = vsel %vm918, 1, 0
  %v935 = vsel %vm919, 1, 0
  %v936 = vsel %vm920, 1, 0
  %v937 = vsel %vm921, 1, 0
  %v938 = vsel %vm922, 1, 0
  %v939 = vsel %vm923, 1, 0
  %v940 = vsel %vm924, 1, 0
  %v941 = vsel %vm925, 1, 0
  %v942 = vcvt.s32.f32 %v926
  %v943 = vcvt.s32.f32 %v927
  %v944 = vcvt.s32.f32 %v928
  %v945 = vcvt.s32.f32 %v929
  %v946 = vcvt.s32.f32 %v930
  %v947 = vcvt.s32.f32 %v931
  %v948 = vcvt.s32.f32 %v932
  %v949 = vcvt.s32.f32 %v933
  %v950 = vcvt.s32.f32 %v934
  %v951 = vcvt.s32.f32 %v935
  %v952 = vcvt.s32.f32 %v936
  %v953 = vcvt.s32.f32 %v937
  %v954 = vcvt.s32.f32 %v938
  %v955 = vcvt.s32.f32 %v939
  %v956 = vcvt.s32.f32 %v940
  %v957 = vcvt.s32.f32 %v941
  %v958 = vpack.c.bf16 %v943, %v942
  %v959 = vpack.c.bf16 %v945, %v944
  %v960 = vpack.c.bf16 %v947, %v946
  %v961 = vpack.c.bf16 %v949, %v948
  %v962 = vpack.c.bf16 %v951, %v950
  %v963 = vpack.c.bf16 %v953, %v952
  %v964 = vpack.c.bf16 %v955, %v954
  %v965 = vpack.c.bf16 %v957, %v956
  %v966 = vld [vmem:[%s1 + $0x80] sm:$0xf]
  %v967 = vld [vmem:[%s1 + $0x84] sm:$0xf]
  %v968 = vld [vmem:[%s1 + $0x88] sm:$0xf]
  %v969 = vld [vmem:[%s1 + $0x8c] sm:$0xf]
  %v970 = vld [vmem:[%s1 + $0x90] sm:$0xf]
  %v971 = vld [vmem:[%s1 + $0x94] sm:$0xf]
  %v972 = vld [vmem:[%s1 + $0x98] sm:$0xf]
  %v973 = vld [vmem:[%s1 + $0x9c] sm:$0xf]
  %v974 = vld [vmem:[%s1 + $0xa0] sm:$0xf]
  %v975 = vld [vmem:[%s1 + $0xa4] sm:$0xf]
  %v976 = vld [vmem:[%s1 + $0xa8] sm:$0xf]
  %v977 = vld [vmem:[%s1 + $0xac] sm:$0xf]
  %v978 = vld [vmem:[%s1 + $0xb0] sm:$0xf]
  %v979 = vld [vmem:[%s1 + $0xb4] sm:$0xf]
  %v980 = vld [vmem:[%s1 + $0xb8] sm:$0xf]
  %v981 = vld [vmem:[%s1 + $0xbc] sm:$0xf]
  %v982 = vld [vmem:[%s1 + $0xc0] sm:$0xf]
  %v983 = vld [vmem:[%s1 + $0xc4] sm:$0xf]
  %v984 = vld [vmem:[%s1 + $0xc8] sm:$0xf]
  %v985 = vld [vmem:[%s1 + $0xcc] sm:$0xf]
  %v986 = vld [vmem:[%s1 + $0xd0] sm:$0xf]
  %v987 = vld [vmem:[%s1 + $0xd4] sm:$0xf]
  %v988 = vld [vmem:[%s1 + $0xd8] sm:$0xf]
  %v989 = vld [vmem:[%s1 + $0xdc] sm:$0xf]
  %v990 = vld [vmem:[%s1 + $0xe0] sm:$0xf]
  %v991 = vld [vmem:[%s1 + $0xe4] sm:$0xf]
  %v992 = vld [vmem:[%s1 + $0xe8] sm:$0xf]
  %v993 = vld [vmem:[%s1 + $0xec] sm:$0xf]
  %v994 = vld [vmem:[%s1 + $0xf0] sm:$0xf]
  %v995 = vld [vmem:[%s1 + $0xf4] sm:$0xf]
  %v996 = vld [vmem:[%s1 + $0xf8] sm:$0xf]
  %v997 = vld [vmem:[%s1 + $0xfc] sm:$0xf]
  %v998 = vld [vmem:[%s2 + $0x80] sm:$0xf]
  %v999 = vld [vmem:[%s2 + $0x84] sm:$0xf]
  %v1000 = vld [vmem:[%s2 + $0x88] sm:$0xf]
  %v1001 = vld [vmem:[%s2 + $0x8c] sm:$0xf]
  %v1002 = vld [vmem:[%s2 + $0x90] sm:$0xf]
  %v1003 = vld [vmem:[%s2 + $0x94] sm:$0xf]
  %v1004 = vld [vmem:[%s2 + $0x98] sm:$0xf]
  %v1005 = vld [vmem:[%s2 + $0x9c] sm:$0xf]
  %v1006 = vld [vmem:[%s2 + $0xa0] sm:$0xf]
  %v1007 = vld [vmem:[%s2 + $0xa4] sm:$0xf]
  %v1008 = vld [vmem:[%s2 + $0xa8] sm:$0xf]
  %v1009 = vld [vmem:[%s2 + $0xac] sm:$0xf]
  %v1010 = vld [vmem:[%s2 + $0xb0] sm:$0xf]
  %v1011 = vld [vmem:[%s2 + $0xb4] sm:$0xf]
  %v1012 = vld [vmem:[%s2 + $0xb8] sm:$0xf]
  %v1013 = vld [vmem:[%s2 + $0xbc] sm:$0xf]
  %v1014 = vld [vmem:[%s2 + $0xc0] sm:$0xf]
  %v1015 = vld [vmem:[%s2 + $0xc4] sm:$0xf]
  %v1016 = vld [vmem:[%s2 + $0xc8] sm:$0xf]
  %v1017 = vld [vmem:[%s2 + $0xcc] sm:$0xf]
  %v1018 = vld [vmem:[%s2 + $0xd0] sm:$0xf]
  %v1019 = vld [vmem:[%s2 + $0xd4] sm:$0xf]
  %v1020 = vld [vmem:[%s2 + $0xd8] sm:$0xf]
  %v1021 = vld [vmem:[%s2 + $0xdc] sm:$0xf]
  %v1022 = vld [vmem:[%s2 + $0xe0] sm:$0xf]
  %v1023 = vld [vmem:[%s2 + $0xe4] sm:$0xf]
  %v1024 = vld [vmem:[%s2 + $0xe8] sm:$0xf]
  %v1025 = vld [vmem:[%s2 + $0xec] sm:$0xf]
  %v1026 = vld [vmem:[%s2 + $0xf0] sm:$0xf]
  %v1027 = vld [vmem:[%s2 + $0xf4] sm:$0xf]
  %v1028 = vld [vmem:[%s2 + $0xf8] sm:$0xf]
  %v1029 = vld [vmem:[%s2 + $0xfc] sm:$0xf]
  %v1062 = vunpack.c.l.b16 %v998
  %v1063 = vunpack.c.l.b16 %v999
  %v1064 = vunpack.c.l.b16 %v1000
  %v1065 = vunpack.c.l.b16 %v1001
  %v1066 = vunpack.c.l.b16 %v1002
  %v1067 = vunpack.c.l.b16 %v1003
  %v1068 = vunpack.c.l.b16 %v1004
  %v1069 = vunpack.c.l.b16 %v1005
  %v1070 = vunpack.c.l.b16 %v1006
  %v1071 = vunpack.c.l.b16 %v1007
  %v1072 = vunpack.c.l.b16 %v1008
  %v1073 = vunpack.c.l.b16 %v1009
  %v1074 = vunpack.c.l.b16 %v1010
  %v1075 = vunpack.c.l.b16 %v1011
  %v1076 = vunpack.c.l.b16 %v1012
  %v1077 = vunpack.c.l.b16 %v1013
  %v1078 = vunpack.c.l.b16 %v1014
  %v1079 = vunpack.c.l.b16 %v1015
  %v1080 = vunpack.c.l.b16 %v1016
  %v1081 = vunpack.c.l.b16 %v1017
  %v1082 = vunpack.c.l.b16 %v1018
  %v1083 = vunpack.c.l.b16 %v1019
  %v1084 = vunpack.c.l.b16 %v1020
  %v1085 = vunpack.c.l.b16 %v1021
  %v1086 = vunpack.c.l.b16 %v1022
  %v1087 = vunpack.c.l.b16 %v1023
  %v1088 = vunpack.c.l.b16 %v1024
  %v1089 = vunpack.c.l.b16 %v1025
  %v1090 = vunpack.c.l.b16 %v1026
  %v1091 = vunpack.c.l.b16 %v1027
  %v1092 = vunpack.c.l.b16 %v1028
  %v1093 = vunpack.c.l.b16 %v1029
  %v1094 = vpack.c.b16 %v1063, %v1062
  %v1095 = vpack.c.b16 %v1065, %v1064
  %v1096 = vpack.c.b16 %v1067, %v1066
  %v1097 = vpack.c.b16 %v1069, %v1068
  %v1098 = vpack.c.b16 %v1071, %v1070
  %v1099 = vpack.c.b16 %v1073, %v1072
  %v1100 = vpack.c.b16 %v1075, %v1074
  %v1101 = vpack.c.b16 %v1077, %v1076
  %v1102 = vpack.c.b16 %v1079, %v1078
  %v1103 = vpack.c.b16 %v1081, %v1080
  %v1104 = vpack.c.b16 %v1083, %v1082
  %v1105 = vpack.c.b16 %v1085, %v1084
  %v1106 = vpack.c.b16 %v1087, %v1086
  %v1107 = vpack.c.b16 %v1089, %v1088
  %v1108 = vpack.c.b16 %v1091, %v1090
  %v1109 = vpack.c.b16 %v1093, %v1092
  %1126 = vmatprep.subr.bf16.mxu0 0
  %1127 = vmatpush1.bf16.msra.mxu0 %v1101
  %1128 = vmatprep.subr.bf16.mxu0 0
  %1129 = vmatpush1.bf16.msra.mxu0 %v1100
  %1130 = vmatprep.subr.bf16.mxu0 0
  %1131 = vmatpush1.bf16.msra.mxu0 %v1099
  %1132 = vmatprep.subr.bf16.mxu0 0
  %1133 = vmatpush1.bf16.msra.mxu0 %v1098
  %1134 = vmatprep.subr.bf16.mxu0 0
  %1135 = vmatpush1.bf16.msra.mxu0 %v1097
  %1136 = vmatprep.subr.bf16.mxu0 0
  %1137 = vmatpush1.bf16.msra.mxu0 %v1096
  %1138 = vmatprep.subr.bf16.mxu0 0
  %1139 = vmatpush1.bf16.msra.mxu0 %v1095
  %1140 = vmatprep.subr.bf16.mxu0 0
  %1141 = vmatpush1.bf16.msra.mxu0 %v1094
  %1142 = vmatprep.subr.bf16.mxu0 0
  %1143 = vmatpush2.bf16.msra.mxu0 %v1109
  %1144 = vmatprep.subr.bf16.mxu0 0
  %1145 = vmatpush2.bf16.msra.mxu0 %v1108
  %1146 = vmatprep.subr.bf16.mxu0 0
  %1147 = vmatpush2.bf16.msra.mxu0 %v1107
  %1148 = vmatprep.subr.bf16.mxu0 0
  %1149 = vmatpush2.bf16.msra.mxu0 %v1106
  %1150 = vmatprep.subr.bf16.mxu0 0
  %1151 = vmatpush2.bf16.msra.mxu0 %v1105
  %1152 = vmatprep.subr.bf16.mxu0 0
  %1153 = vmatpush2.bf16.msra.mxu0 %v1104
  %1154 = vmatprep.subr.bf16.mxu0 0
  %1155 = vmatpush2.bf16.msra.mxu0 %v1103
  %1156 = vmatprep.subr.bf16.mxu0 0
  %1157 = vmatpush2.bf16.msra.mxu0 %v1102
  %1158 = vmatprep.mubr.bf16.mxu0 %v958
  %1159 = vmatmul.mubr.bf16.gmra.mxu0 %v838
  %v1160 = vpop.f32.mrf.mxu0
  %v1161 = vadd.f32 0.0, %v1160
  %v1162 = vpop.f32.mrf.mxu0
  %v1163 = vpop.f32.mrf.mxu0
  %v1164 = vadd.f32 0.0, %v1163
  %v1165 = vpop.f32.mrf.mxu0
  %1166 = vmatprep.mubr.bf16.mxu0 %v959
  %1167 = vmatmul.mubr.bf16.gmra.mxu0 %v839
  %v1168 = vpop.f32.mrf.mxu0
  %v1169 = vadd.f32 0.0, %v1168
  %v1170 = vpop.f32.mrf.mxu0
  %v1171 = vpop.f32.mrf.mxu0
  %v1172 = vadd.f32 0.0, %v1171
  %v1173 = vpop.f32.mrf.mxu0
  %1174 = vmatprep.mubr.bf16.mxu0 %v960
  %1175 = vmatmul.mubr.bf16.gmra.mxu0 %v840
  %v1176 = vpop.f32.mrf.mxu0
  %v1177 = vadd.f32 0.0, %v1176
  %v1178 = vpop.f32.mrf.mxu0
  %v1179 = vpop.f32.mrf.mxu0
  %v1180 = vadd.f32 0.0, %v1179
  %v1181 = vpop.f32.mrf.mxu0
  %1182 = vmatprep.mubr.bf16.mxu0 %v961
  %1183 = vmatmul.mubr.bf16.gmra.mxu0 %v841
  %v1184 = vpop.f32.mrf.mxu0
  %v1185 = vadd.f32 0.0, %v1184
  %v1186 = vpop.f32.mrf.mxu0
  %v1187 = vpop.f32.mrf.mxu0
  %v1188 = vadd.f32 0.0, %v1187
  %v1189 = vpop.f32.mrf.mxu0
  %1190 = vmatprep.mubr.bf16.mxu0 %v962
  %1191 = vmatmul.mubr.bf16.gmra.mxu0 %v842
  %v1192 = vpop.f32.mrf.mxu0
  %v1193 = vadd.f32 0.0, %v1192
  %v1194 = vpop.f32.mrf.mxu0
  %v1195 = vpop.f32.mrf.mxu0
  %v1196 = vadd.f32 0.0, %v1195
  %v1197 = vpop.f32.mrf.mxu0
  %1198 = vmatprep.mubr.bf16.mxu0 %v963
  %1199 = vmatmul.mubr.bf16.gmra.mxu0 %v843
  %v1200 = vpop.f32.mrf.mxu0
  %v1201 = vadd.f32 0.0, %v1200
  %v1202 = vpop.f32.mrf.mxu0
  %v1203 = vpop.f32.mrf.mxu0
  %v1204 = vadd.f32 0.0, %v1203
  %v1205 = vpop.f32.mrf.mxu0
  %1206 = vmatprep.mubr.bf16.mxu0 %v964
  %1207 = vmatmul.mubr.bf16.gmra.mxu0 %v844
  %v1208 = vpop.f32.mrf.mxu0
  %v1209 = vadd.f32 0.0, %v1208
  %v1210 = vpop.f32.mrf.mxu0
  %v1211 = vpop.f32.mrf.mxu0
  %v1212 = vadd.f32 0.0, %v1211
  %v1213 = vpop.f32.mrf.mxu0
  %1214 = vmatprep.mubr.bf16.mxu0 %v965
  %1215 = vmatmul.mubr.bf16.gmra.mxu0 %v845
  %v1216 = vpop.f32.mrf.mxu0
  %v1217 = vadd.f32 0.0, %v1216
  %v1218 = vpop.f32.mrf.mxu0
  %v1219 = vpop.f32.mrf.mxu0
  %v1220 = vadd.f32 0.0, %v1219
  %v1221 = vpop.f32.mrf.mxu0
  %1222 = vdwg.mxu0
  %v1255 = vunpack.c.l.b16 %v966
  %v1256 = vunpack.c.l.b16 %v967
  %v1257 = vunpack.c.l.b16 %v968
  %v1258 = vunpack.c.l.b16 %v969
  %v1259 = vunpack.c.l.b16 %v970
  %v1260 = vunpack.c.l.b16 %v971
  %v1261 = vunpack.c.l.b16 %v972
  %v1262 = vunpack.c.l.b16 %v973
  %v1263 = vunpack.c.l.b16 %v974
  %v1264 = vunpack.c.l.b16 %v975
  %v1265 = vunpack.c.l.b16 %v976
  %v1266 = vunpack.c.l.b16 %v977
  %v1267 = vunpack.c.l.b16 %v978
  %v1268 = vunpack.c.l.b16 %v979
  %v1269 = vunpack.c.l.b16 %v980
  %v1270 = vunpack.c.l.b16 %v981
  %v1271 = vunpack.c.l.b16 %v982
  %v1272 = vunpack.c.l.b16 %v983
  %v1273 = vunpack.c.l.b16 %v984
  %v1274 = vunpack.c.l.b16 %v985
  %v1275 = vunpack.c.l.b16 %v986
  %v1276 = vunpack.c.l.b16 %v987
  %v1277 = vunpack.c.l.b16 %v988
  %v1278 = vunpack.c.l.b16 %v989
  %v1279 = vunpack.c.l.b16 %v990
  %v1280 = vunpack.c.l.b16 %v991
  %v1281 = vunpack.c.l.b16 %v992
  %v1282 = vunpack.c.l.b16 %v993
  %v1283 = vunpack.c.l.b16 %v994
  %v1284 = vunpack.c.l.b16 %v995
  %v1285 = vunpack.c.l.b16 %v996
  %v1286 = vunpack.c.l.b16 %v997
  %v1287 = vpack.c.b16 %v1256, %v1255
  %v1288 = vpack.c.b16 %v1258, %v1257
  %v1289 = vpack.c.b16 %v1260, %v1259
  %v1290 = vpack.c.b16 %v1262, %v1261
  %v1291 = vpack.c.b16 %v1264, %v1263
  %v1292 = vpack.c.b16 %v1266, %v1265
  %v1293 = vpack.c.b16 %v1268, %v1267
  %v1294 = vpack.c.b16 %v1270, %v1269
  %v1295 = vpack.c.b16 %v1272, %v1271
  %v1296 = vpack.c.b16 %v1274, %v1273
  %v1297 = vpack.c.b16 %v1276, %v1275
  %v1298 = vpack.c.b16 %v1278, %v1277
  %v1299 = vpack.c.b16 %v1280, %v1279
  %v1300 = vpack.c.b16 %v1282, %v1281
  %v1301 = vpack.c.b16 %v1284, %v1283
  %v1302 = vpack.c.b16 %v1286, %v1285
  %1319 = vmatprep.subr.bf16.mxu0 0
  %1320 = vmatpush1.bf16.msra.mxu0 %v1294
  %1321 = vmatprep.subr.bf16.mxu0 0
  %1322 = vmatpush1.bf16.msra.mxu0 %v1293
  %1323 = vmatprep.subr.bf16.mxu0 0
  %1324 = vmatpush1.bf16.msra.mxu0 %v1292
  %1325 = vmatprep.subr.bf16.mxu0 0
  %1326 = vmatpush1.bf16.msra.mxu0 %v1291
  %1327 = vmatprep.subr.bf16.mxu0 0
  %1328 = vmatpush1.bf16.msra.mxu0 %v1290
  %1329 = vmatprep.subr.bf16.mxu0 0
  %1330 = vmatpush1.bf16.msra.mxu0 %v1289
  %1331 = vmatprep.subr.bf16.mxu0 0
  %1332 = vmatpush1.bf16.msra.mxu0 %v1288
  %1333 = vmatprep.subr.bf16.mxu0 0
  %1334 = vmatpush1.bf16.msra.mxu0 %v1287
  %1335 = vmatprep.subr.bf16.mxu0 0
  %1336 = vmatpush2.bf16.msra.mxu0 %v1302
  %1337 = vmatprep.subr.bf16.mxu0 0
  %1338 = vmatpush2.bf16.msra.mxu0 %v1301
  %1339 = vmatprep.subr.bf16.mxu0 0
  %1340 = vmatpush2.bf16.msra.mxu0 %v1300
  %1341 = vmatprep.subr.bf16.mxu0 0
  %1342 = vmatpush2.bf16.msra.mxu0 %v1299
  %1343 = vmatprep.subr.bf16.mxu0 0
  %1344 = vmatpush2.bf16.msra.mxu0 %v1298
  %1345 = vmatprep.subr.bf16.mxu0 0
  %1346 = vmatpush2.bf16.msra.mxu0 %v1297
  %1347 = vmatprep.subr.bf16.mxu0 0
  %1348 = vmatpush2.bf16.msra.mxu0 %v1296
  %1349 = vmatprep.subr.bf16.mxu0 0
  %1350 = vmatpush2.bf16.msra.mxu0 %v1295
  %1351 = vmatprep.mubr.bf16.mxu0 %v958
  %1352 = vmatmul.mubr.bf16.gmra.mxu0 %v838
  %v1353 = vpop.f32.mrf.mxu0
  %v1354 = vadd.f32 %v1161, %v1353
  %v1355 = vpop.f32.mrf.mxu0
  %v1356 = vpop.f32.mrf.mxu0
  %v1357 = vadd.f32 %v1164, %v1356
  %v1358 = vpop.f32.mrf.mxu0
  %1359 = vmatprep.mubr.bf16.mxu0 %v959
  %1360 = vmatmul.mubr.bf16.gmra.mxu0 %v839
  %v1361 = vpop.f32.mrf.mxu0
  %v1362 = vadd.f32 %v1169, %v1361
  %v1363 = vpop.f32.mrf.mxu0
  %v1364 = vpop.f32.mrf.mxu0
  %v1365 = vadd.f32 %v1172, %v1364
  %v1366 = vpop.f32.mrf.mxu0
  %1367 = vmatprep.mubr.bf16.mxu0 %v960
  %1368 = vmatmul.mubr.bf16.gmra.mxu0 %v840
  %v1369 = vpop.f32.mrf.mxu0
  %v1370 = vadd.f32 %v1177, %v1369
  %v1371 = vpop.f32.mrf.mxu0
  %v1372 = vpop.f32.mrf.mxu0
  %v1373 = vadd.f32 %v1180, %v1372
  %v1374 = vpop.f32.mrf.mxu0
  %1375 = vmatprep.mubr.bf16.mxu0 %v961
  %1376 = vmatmul.mubr.bf16.gmra.mxu0 %v841
  %v1377 = vpop.f32.mrf.mxu0
  %v1378 = vadd.f32 %v1185, %v1377
  %v1379 = vpop.f32.mrf.mxu0
  %v1380 = vpop.f32.mrf.mxu0
  %v1381 = vadd.f32 %v1188, %v1380
  %v1382 = vpop.f32.mrf.mxu0
  %1383 = vmatprep.mubr.bf16.mxu0 %v962
  %1384 = vmatmul.mubr.bf16.gmra.mxu0 %v842
  %v1385 = vpop.f32.mrf.mxu0
  %v1386 = vadd.f32 %v1193, %v1385
  %v1387 = vpop.f32.mrf.mxu0
  %v1388 = vpop.f32.mrf.mxu0
  %v1389 = vadd.f32 %v1196, %v1388
  %v1390 = vpop.f32.mrf.mxu0
  %1391 = vmatprep.mubr.bf16.mxu0 %v963
  %1392 = vmatmul.mubr.bf16.gmra.mxu0 %v843
  %v1393 = vpop.f32.mrf.mxu0
  %v1394 = vadd.f32 %v1201, %v1393
  %v1395 = vpop.f32.mrf.mxu0
  %v1396 = vpop.f32.mrf.mxu0
  %v1397 = vadd.f32 %v1204, %v1396
  %v1398 = vpop.f32.mrf.mxu0
  %1399 = vmatprep.mubr.bf16.mxu0 %v964
  %1400 = vmatmul.mubr.bf16.gmra.mxu0 %v844
  %v1401 = vpop.f32.mrf.mxu0
  %v1402 = vadd.f32 %v1209, %v1401
  %v1403 = vpop.f32.mrf.mxu0
  %v1404 = vpop.f32.mrf.mxu0
  %v1405 = vadd.f32 %v1212, %v1404
  %v1406 = vpop.f32.mrf.mxu0
  %1407 = vmatprep.mubr.bf16.mxu0 %v965
  %1408 = vmatmul.mubr.bf16.gmra.mxu0 %v845
  %v1409 = vpop.f32.mrf.mxu0
  %v1410 = vadd.f32 %v1217, %v1409
  %v1411 = vpop.f32.mrf.mxu0
  %v1412 = vpop.f32.mrf.mxu0
  %v1413 = vadd.f32 %v1220, %v1412
  %v1414 = vpop.f32.mrf.mxu0
  %1415 = vdwg.mxu0
  %v1416 = vadd.f32 %v664, %v1354
  %v1417 = vadd.f32 %v667, %v1357
  %v1418 = vadd.f32 %v672, %v1362
  %v1419 = vadd.f32 %v675, %v1365
  %v1420 = vadd.f32 %v680, %v1370
  %v1421 = vadd.f32 %v683, %v1373
  %v1422 = vadd.f32 %v688, %v1378
  %v1423 = vadd.f32 %v691, %v1381
  %v1424 = vadd.f32 %v696, %v1386
  %v1425 = vadd.f32 %v699, %v1389
  %v1426 = vadd.f32 %v704, %v1394
  %v1427 = vadd.f32 %v707, %v1397
  %v1428 = vadd.f32 %v712, %v1402
  %v1429 = vadd.f32 %v715, %v1405
  %v1430 = vadd.f32 %v720, %v1410
  %v1431 = vadd.f32 %v723, %v1413
  %1432 = vst [vmem:[%s3] sm:$0xff] %v1416
  %1433 = vst [vmem:[%s3 + $0x8] sm:$0xff] %v1417
  %1434 = vst [vmem:[%s3 + $0x10] sm:$0xff] %v1418
  %1435 = vst [vmem:[%s3 + $0x18] sm:$0xff] %v1419
  %1436 = vst [vmem:[%s3 + $0x20] sm:$0xff] %v1420
  %1437 = vst [vmem:[%s3 + $0x28] sm:$0xff] %v1421
  %1438 = vst [vmem:[%s3 + $0x30] sm:$0xff] %v1422
  %1439 = vst [vmem:[%s3 + $0x38] sm:$0xff] %v1423
  %1440 = vst [vmem:[%s3 + $0x40] sm:$0xff] %v1424
  %1441 = vst [vmem:[%s3 + $0x48] sm:$0xff] %v1425
  %1442 = vst [vmem:[%s3 + $0x50] sm:$0xff] %v1426
  %1443 = vst [vmem:[%s3 + $0x58] sm:$0xff] %v1427
  %1444 = vst [vmem:[%s3 + $0x60] sm:$0xff] %v1428
  %1445 = vst [vmem:[%s3 + $0x68] sm:$0xff] %v1429
  %1446 = vst [vmem:[%s3 + $0x70] sm:$0xff] %v1430
  %1447 = vst [vmem:[%s3 + $0x78] sm:$0xff] %v1431
  // Predicated region
  $region14: #{positional_encodings.1} parent=0 // pred_check
    _
  $region15: #{positional_encodings.1} parent=0 // pred_check_branch
    %1449 = sbr.rel (0) target = $region17
  $region16: #{positional_encodings.1} parent=0 // pred_region
    _
  $region17: #{positional_encodings.1} parent=0 // pred_fallthru
    _
  // Predicated region
  $region18: #{positional_encodings.1} parent=0 // pred_check
    _
  $region19: #{positional_encodings.1} parent=0 // pred_check_branch
    %1451 = sbr.rel (0) target = $region21
  $region20: #{positional_encodings.1} parent=0 // pred_region
    _
  $region21: #{positional_encodings.1} parent=0 // pred_fallthru
    _

</llo_original>
